<compile_context>
chip_gen: v7x
topology: tpu7x:2x2x1
jax: 0.10.0
libtpu: 0.0.40
codegen_flags: <defaults>
</compile_context>

<pallas_src>
import numpy as np
import jax
import jax.numpy as jnp
from jax.experimental import pallas as pl
from jax.experimental.pallas import tpu as pltpu


def _round_up(x, m):
    return ((x + m - 1) // m) * m


def _patch2im_kernel(x_ref, sw_ref, sht_ref, rc_ref, o_ref):
    # x_ref  : (tm*Khp, Kwp)  patches; rows = (m, ki, a), cols = (kj, b)
    # sw_ref : (Kwp, tw)      0/1 W-direction fold matrix (column tile)
    # sht_ref: (Hp, Khp)      0/1 H-direction fold matrix, transposed
    # rc_ref : (Hp, tw)       precomputed reciprocal overlap counts (tile)
    # o_ref  : (tm, Hp, tw)   averaged reconstruction tile
    hp, khp = sht_ref.shape
    tw = sw_ref.shape[1]
    tm = x_ref.shape[0] // khp

    # Stage 1: fold along W — one lane-dense 2-D MXU matmul; the (ki, a) axis is
    # folded into the row dim so the MXU sees >=128 rows even for small N*C.
    y = jnp.dot(x_ref[...], sw_ref[...], preferred_element_type=jnp.float32)
    y = y.reshape(tm, khp, tw)          # tile-aligned split (khp % 8 == 0, tw % 128 == 0)

    # Stage 2: fold along H — batched MXU matmul over the m-tile.
    sht = jnp.broadcast_to(sht_ref[...], (tm, hp, khp))
    out = jnp.einsum("mhk,mkw->mhw", sht, y, preferred_element_type=jnp.float32)

    # Divide-by-counts as a broadcast multiply with the precomputed reciprocal.
    o_ref[...] = (out * rc_ref[...]).astype(o_ref.dtype)


def _make_fold_matrices(p, s, nh, nw):
    H = (nh - 1) * s + p
    W = (nw - 1) * s + p
    Kh, Kw = p * nh, p * nw
    Hp, Wp = _round_up(H, 8), _round_up(W, 128)
    Khp, Kwp = _round_up(Kh, 8), _round_up(Kw, 128)

    # S_w[(kj, b), j] = 1  iff  j == b*s + kj
    Sw = np.zeros((Kwp, Wp), np.float32)
    kj, b = np.meshgrid(np.arange(p), np.arange(nw), indexing="ij")
    Sw[(kj * nw + b).ravel(), (b * s + kj).ravel()] = 1.0

    # S_h^T[i, (ki, a)] = 1  iff  i == a*s + ki
    ShT = np.zeros((Hp, Khp), np.float32)
    ki, a = np.meshgrid(np.arange(p), np.arange(nh), indexing="ij")
    ShT[(a * s + ki).ravel(), (ki * nh + a).ravel()] = 1.0

    # Overlap counts are a rank-1 outer product; precompute the reciprocal on the
    # host (0 in padded rows/cols — those get cropped anyway).
    ch = ShT.sum(axis=1)                        # (Hp,) per-image-row count
    cw = Sw.sum(axis=0)                         # (Wp,) per-image-col count
    cnt = np.outer(ch, cw)
    recip = np.where(cnt > 0, 1.0 / np.maximum(cnt, 1.0), 0.0).astype(np.float32)
    return Sw, ShT, recip, H, W, Hp, Wp, Kh, Kw, Khp, Kwp


def patch2im(x_patch, patchsize, stride, padding, *, tile_m=128, tile_w=256):
    N, C, p1, p2, nh, nw = x_patch.shape
    assert p1 == patchsize and p2 == patchsize
    p, s = patchsize, stride

    (Sw_np, ShT_np, recip_np,
     H, W, Hp, Wp, Kh, Kw, Khp, Kwp) = _make_fold_matrices(p, s, nh, nw)
    Sw, ShT, recip = jnp.asarray(Sw_np), jnp.asarray(ShT_np), jnp.asarray(recip_np)

    M = N * C
    tm = max(1, min(tile_m, M))
    Mp = _round_up(M, tm)
    tw = max(128, (min(tile_w, Wp) // 128) * 128)
    while Wp % tw:                 # Wp is a multiple of 128, so this terminates at 128
        tw -= 128

    # (N,C,ki,kj,a,b) -> (N,C,ki,a,kj,b) -> (M, p*nh, p*nw), zero-pad, flatten rows.
    x = jnp.transpose(x_patch, (0, 1, 2, 4, 3, 5)).reshape(M, Kh, Kw)
    x = jnp.pad(x.astype(jnp.float32), ((0, Mp - M), (0, Khp - Kh), (0, Kwp - Kw)))
    x2d = x.reshape(Mp * Khp, Kwp)

    # Explicit VMEM budget: double-buffered blocks + in-kernel intermediates.
    est = 4 * (2 * tm * Khp * Kwp + 2 * Kwp * tw + 2 * Hp * Khp + 2 * Hp * tw
               + 2 * tm * Hp * tw + tm * Khp * tw + tm * Hp * Khp)
    vmem_limit = int(min(48 * 2**20, max(2 * est, 32 * 2**20)))

    grid = (Mp // tm, Wp // tw)
    outp = pl.pallas_call(
        _patch2im_kernel,
        out_shape=jax.ShapeDtypeStruct((Mp, Hp, Wp), jnp.float32),
        grid_spec=pltpu.PrefetchScalarGridSpec(
            num_scalar_prefetch=0,
            grid=grid,
            in_specs=[
                pl.BlockSpec((tm * Khp, Kwp), lambda i, j: (i, 0)),  # patch rows of this m-tile
                pl.BlockSpec((Kwp, tw), lambda i, j: (0, j)),        # S_w column tile
                pl.BlockSpec((Hp, Khp), lambda i, j: (0, 0)),        # S_h^T (small, resident)
                pl.BlockSpec((Hp, tw), lambda i, j: (0, j)),         # 1/counts tile
            ],
            out_specs=pl.BlockSpec((tm, Hp, tw), lambda i, j: (i, 0, j)),
        ),
        compiler_params=pltpu.CompilerParams(
            dimension_semantics=("parallel", "parallel"),
            vmem_limit_bytes=vmem_limit,
        ),
    )(x2d, Sw, ShT, recip)

    out = outp[:M, :H, :W].reshape(N, C, H, W)
    padtop, padbottom, padleft, padright = padding
    out = out[:, :, padtop:H - padbottom, padleft:W - padright]
    return out.astype(x_patch.dtype)


class Patch2Im:
    """Mirror of the PyTorch nn.Module (forward = patch2im)."""

    def __init__(self, patchsize, stride, padding=None):
        self.patchsize, self.stride, self.padding = patchsize, stride, padding

    def __call__(self, x_patch):
        return patch2im(x_patch, self.patchsize, self.stride, self.padding)


def _ref_patch2im_np(x_patch, p, s, padding):
    # Pure-numpy reference of pyinn.col2im-average-crop.
    x_patch = np.asarray(x_patch, np.float64)
    N, C, _, _, nh, nw = x_patch.shape
    H = (nh - 1) * s + p
    W = (nw - 1) * s + p
    out = np.zeros((N, C, H, W))
    cnt = np.zeros((N, C, H, W))
    for ki in range(p):
        for kj in range(p):
            ii = ki + s * np.arange(nh)
            jj = kj + s * np.arange(nw)
            out[:, :, ii[:, None], jj[None, :]] += x_patch[:, :, ki, kj]
            cnt[:, :, ii[:, None], jj[None, :]] += 1.0
    out = out / cnt
    pt, pb, plft, pr = padding
    return out[:, :, pt:H - pb, plft:W - pr]


if __name__ == "__main__":
    key = jax.random.PRNGKey(0)
    k1, k2 = jax.random.split(key)

    # Case 1: small deterministic example (N=2, C=4, p=4, s=2, 7x7 patch grid ->
    # 16x16 image, cropped to 14x14).  tile_m=4 exercises the M-tiled grid (2,1).
    p, s = 4, 2
    pad = (1, 1, 1, 1)
    xp1 = jax.random.normal(k1, (2, 4, p, p, 7, 7), dtype=jnp.float32)
    out1 = jax.block_until_ready(patch2im(xp1, p, s, pad, tile_m=4))
    ref1 = _ref_patch2im_np(np.asarray(xp1), p, s, pad)
    assert out1.shape == ref1.shape, (out1.shape, ref1.shape)
    np.testing.assert_allclose(np.asarray(out1), ref1, rtol=1e-4, atol=1e-4)

    # Case 2: wider image (p=6, s=2, 5x70 patch grid -> 14x144 image) exercising
    # W-tiling (grid (1,2) with tile_w=128) and M/K/H/W zero-padding paths.
    p2_, s2_ = 6, 2
    pad2 = (2, 2, 3, 3)
    xp2 = jax.random.normal(k2, (1, 3, p2_, p2_, 5, 70), dtype=jnp.float32)
    out2 = jax.block_until_ready(patch2im(xp2, p2_, s2_, pad2, tile_w=128))
    ref2 = _ref_patch2im_np(np.asarray(xp2), p2_, s2_, pad2)
    assert out2.shape == ref2.shape, (out2.shape, ref2.shape)
    np.testing.assert_allclose(np.asarray(out2), ref2, rtol=1e-4, atol=1e-4)

    print("KERNEL_OK")
</pallas_src>

<mosaic_0001>
module attributes {stable_mosaic.version = 11 : i64} {
  func.func @_patch2im_kernel(%arg0: i32, %arg1: i32, %arg2: memref<128x128xf32, #tpu.memory_space<vmem>>, %arg3: memref<128x128xf32, #tpu.memory_space<vmem>>, %arg4: memref<16x32xf32, #tpu.memory_space<vmem>>, %arg5: memref<16x128xf32, #tpu.memory_space<vmem>>, %arg6: memref<4x16x128xf32, #tpu.memory_space<vmem>>) attributes {dimension_semantics = [#tpu.dimension_semantics<parallel>, #tpu.dimension_semantics<parallel>], iteration_bounds = array<i64: 2, 1>, scalar_prefetch = 0 : i64, scratch_operands = 0 : i64, tpu.core_type = #tpu.core_type<tc>, window_params = [{transform_indices = @transform_0, window_bounds = array<i64: 128, 128>}, {transform_indices = @transform_1, window_bounds = array<i64: 128, 128>}, {pipeline_mode = #tpu.pipeline_mode<synchronous>, transform_indices = @transform_2, window_bounds = array<i64: 16, 32>}, {transform_indices = @transform_3, window_bounds = array<i64: 16, 128>}, {transform_indices = @transform_4, window_bounds = array<i64: 4, 16, 128>}]} {
    %c0 = arith.constant 0 : index
    %c0_0 = arith.constant 0 : index
    %0 = vector.load %arg2[%c0, %c0_0] : memref<128x128xf32, #tpu.memory_space<vmem>>, vector<128x128xf32>
    %c0_1 = arith.constant 0 : index
    %c0_2 = arith.constant 0 : index
    %1 = vector.load %arg3[%c0_1, %c0_2] : memref<128x128xf32, #tpu.memory_space<vmem>>, vector<128x128xf32>
    %cst = arith.constant dense<0.000000e+00> : vector<128x128xf32>
    %2 = tpu.matmul %0, %1, %cst {dimension_numbers = #tpu.dot_dimension_numbers<[1], [0], [0], [1], [0, 0, 1, 1], [], []>} : vector<128x128xf32>, vector<128x128xf32>, vector<128x128xf32> -> vector<128x128xf32>
    %3 = vector.shape_cast %2 : vector<128x128xf32> to vector<4x32x128xf32>
    %c0_3 = arith.constant 0 : index
    %c0_4 = arith.constant 0 : index
    %4 = vector.load %arg4[%c0_3, %c0_4] : memref<16x32xf32, #tpu.memory_space<vmem>>, vector<16x32xf32>
    %5 = vector.shape_cast %4 : vector<16x32xf32> to vector<1x16x32xf32>
    %6 = vector.broadcast %5 : vector<1x16x32xf32> to vector<4x16x32xf32>
    "tpu.trace_start"() <{level = 10 : i32, message = "mhk,mkw->mhw"}> : () -> ()
    %cst_5 = arith.constant dense<0.000000e+00> : vector<4x16x128xf32>
    %7 = tpu.matmul %6, %3, %cst_5 {dimension_numbers = #tpu.dot_dimension_numbers<[2], [1], [1], [2], [0, 0, 0, 1, 1, 2], [0], [0]>} : vector<4x16x32xf32>, vector<4x32x128xf32>, vector<4x16x128xf32> -> vector<4x16x128xf32>
    "tpu.trace_stop"() : () -> ()
    %c0_6 = arith.constant 0 : index
    %c0_7 = arith.constant 0 : index
    %8 = vector.load %arg5[%c0_6, %c0_7] : memref<16x128xf32, #tpu.memory_space<vmem>>, vector<16x128xf32>
    %9 = vector.shape_cast %8 : vector<16x128xf32> to vector<1x16x128xf32>
    %10 = vector.broadcast %9 : vector<1x16x128xf32> to vector<4x16x128xf32>
    %11 = arith.mulf %7, %10 : vector<4x16x128xf32>
    %c0_8 = arith.constant 0 : index
    %c0_9 = arith.constant 0 : index
    %c0_10 = arith.constant 0 : index
    %12 = vector.load %arg6[%c0_8, %c0_9, %c0_10] : memref<4x16x128xf32, #tpu.memory_space<vmem>>, vector<4x16x128xf32>
    tpu.vector_store %arg6[%c0_8, %c0_9, %c0_10], %11 {strides = array<i32>} : memref<4x16x128xf32, #tpu.memory_space<vmem>>, vector<4x16x128xf32>,
    return
  }
  func.func @transform_0(%arg0: i32, %arg1: i32) -> (i32, i32) {
    %c0_i32 = arith.constant 0 : i32
    %c0_i32_0 = arith.constant 0 : i32
    return %arg0, %c0_i32 : i32, i32
  }
  func.func @transform_1(%arg0: i32, %arg1: i32) -> (i32, i32) {
    %c0_i32 = arith.constant 0 : i32
    %c0_i32_0 = arith.constant 0 : i32
    return %c0_i32, %arg1 : i32, i32
  }
  func.func @transform_2(%arg0: i32, %arg1: i32) -> (i32, i32) {
    %c0_i32 = arith.constant 0 : i32
    %c0_i32_0 = arith.constant 0 : i32
    %c0_i32_1 = arith.constant 0 : i32
    return %c0_i32, %c0_i32_0 : i32, i32
  }
  func.func @transform_3(%arg0: i32, %arg1: i32) -> (i32, i32) {
    %c0_i32 = arith.constant 0 : i32
    %c0_i32_0 = arith.constant 0 : i32
    return %c0_i32, %arg1 : i32, i32
  }
  func.func @transform_4(%arg0: i32, %arg1: i32) -> (i32, i32, i32) {
    %c0_i32 = arith.constant 0 : i32
    %c0_i32_0 = arith.constant 0 : i32
    return %arg0, %c0_i32, %arg1 : i32, i32, i32
  }
}

</mosaic_0001>

<llo_original>
// kernel: tpu_custom_call.1
$region0: #{tpu_custom_call.1}
  #allocation0 [shape = 'u32[]', space=smem, size = 0x4, offset = 0x4, fixed_abs, tag = 'smem constant byte address 0x4 - core index']
  #allocation1 [shape = 'u32[144,128]{1,0:T(1,128)}', space=vmem, size = 0x12000, scoped, tag = 'internal scratch']
  %s0 = inlined_call_operand.hbm [shape: f32[256,128], index: 0, kind: input, shape index: {}]
  %s1 = inlined_call_operand.hbm [shape: f32[128,128], index: 1, kind: input, shape index: {}]
  %s2 = inlined_call_operand.hbm [shape: f32[16,32], index: 2, kind: input, shape index: {}]
  %s3 = inlined_call_operand.hbm [shape: f32[16,128], index: 3, kind: input, shape index: {}]
  %s4 = inlined_call_operand.hbm [shape: f32[8,16,128], index: 4, kind: output, shape index: {}]
  %s5 = sld [smem:[#allocation0]]
  $region65: #{tpu_custom_call.1} parent=0
    _
  %s7 = ssub.s32 1, %s5
  %s8 = scalar_select 0, %s7, %s5
  $region1: #{tpu_custom_call.1} parent=0
    #allocation2 [shape = 'u8[131072]{0}', space=vmem, size = 0x20000, scoped, tag = 'input window, operand 0']
    #allocation3 [shape = 's32[2]{0}', space=sflag, size = 0x8, scoped, tag = 'scoped memory for tpu_custom_call.1']
    #allocation4 [shape = 's32[2]{0}', space=sflag, size = 0x8, scoped, tag = 'scoped memory for tpu_custom_call.1']
    #allocation5 [shape = 'u8[65536]{0}', space=vmem, size = 0x10000, scoped, tag = 'input window, operand 1, single buffered']
    #allocation6 [shape = 's32[1]{0}', space=sflag, size = 0x4, scoped, tag = 'scoped memory for tpu_custom_call.1']
    #allocation7 [shape = 'u8[8192]{0}', space=vmem, size = 0x2000, scoped, tag = 'input window, operand 2, single buffered']
    #allocation8 [shape = 'u8[8192]{0}', space=vmem, size = 0x2000, scoped, tag = 'input window, operand 3, single buffered']
    #allocation9 [shape = 's32[1]{0}', space=sflag, size = 0x4, scoped, tag = 'scoped memory for tpu_custom_call.1']
    #allocation10 [shape = 'u8[65536]{0}', space=vmem, size = 0x10000, scoped, tag = 'output window, operand 0']
    %9 = vsyncpa [#allocation3], 0
    %s10 = scalar_lea.sflag [#allocation3], 1
    %11 = vsyncpa %s10, 0
    %12 = vsyncpa [#allocation6], 0
    %13 = vsyncpa [#allocation9], 0
    %14 = vsyncpa [#allocation4], 0
    %s15 = scalar_lea.sflag [#allocation4], 1
    %16 = vsyncpa %s15, 0
    loop: start=0, step=1, limit=4
    $region2: #{tpu_custom_call.1} parent=1 // loop_pre_header
      _
    $region3: #{tpu_custom_call.1} parent=1 // loop_header
      %s18 = sphi 0, %s22
      %p19 = scmp.ge.s32.totalorder %s18, 4
      %s25 = sphi 0, %s37
      %s26 = sphi 0, %s33
      %s27 = sphi 0, %s25
      %s28 = sphi 0, %s26
      %s29 = sphi 0, %s27
      %s30 = sphi 0, %s28
      %s40 = sphi 0, %s42
      %s43 = sphi 0, %s40
      %s44 = sphi 0, %s43
      %s60 = sphi 0, %s44
      %s66 = sphi 0, %s68
      %s69 = sphi 0, %s66
      %s70 = sphi 0, %s69
      %s86 = sphi 0, %s70
      %s90 = sphi 0, %s90
      %s92 = sphi 0, %s90
      %s93 = sphi 0, %s92
      %s107 = sphi 0, %s93
      %s113 = sphi 0, %s115
      %s116 = sphi 0, %s113
      %s117 = sphi 0, %s116
      %s133 = sphi 0, %s117
      %s141 = sphi 0, %s143
      %s144 = sphi 0, %s141
      %s145 = sphi 0, %s144
      %s161 = sphi 0, %s145
    $region4: #{tpu_custom_call.1} parent=1 // loop_header_branch
      %21 = sbr.rel (%p19) target = $region8
    $region5: #{tpu_custom_call.1} parent=1 // loop_body
      %s23 = ssub.s32 %s18, 1
      %s24 = ssub.s32 %s18, 2
      %s31 = sadd.s32 1, %s26
      %p32 = scmp.ge.s32.totalorder %s31, 1
      %s33 = scalar_select %p32, 0, %s31
      %s34 = sadd.s32 1, %s25
      %s35 = scalar_select %p32, %s34, %s25
      %p36 = scmp.ge.s32.totalorder %s35, 2
      %s37 = scalar_select %p36, 0, %s35
      %s38 = ssub.s32 %s25, %s37
      %p39 = scmp.eq.s32.totalorder %s38, 0
      %s41 = sadd.s32 %s40, 1
      %s42 = scalar_select %p39, %s40, %s41
      %p45 = pneg %p39
      %p46 = scmp.eq.s32.totalorder %s18, 1
      %p47 = por %p45, %p46
      %p48 = scmp.ne.s32.totalorder %s40, %s43
      %p49 = scmp.eq.s32.totalorder %s18, 0
      %p50 = por %p48, %p49
      %p51 = scmp.ne.s32.totalorder %s40, %s43
      %p52 = scmp.eq.s32.totalorder %s23, 1
      %p53 = por %p51, %p52
      %p54 = scmp.ne.s32.totalorder %s43, %s44
      %p55 = scmp.eq.s32.totalorder %s23, 0
      %p56 = por %p54, %p55
      %p57 = scmp.ne.s32.totalorder %s43, %s44
      %p58 = scmp.eq.s32.totalorder %s24, 1
      %p59 = por %p57, %p58
      %p61 = scmp.ne.s32.totalorder %s44, %s60
      %p62 = scmp.eq.s32.totalorder %s24, 0
      %p63 = por %p61, %p62
      %s64 = ssub.s32 %s26, %s33
      %p65 = scmp.eq.s32.totalorder %s64, 0
      %s67 = sadd.s32 %s66, 1
      %s68 = scalar_select %p65, %s66, %s67
      %p71 = pneg %p65
      %p72 = scmp.eq.s32.totalorder %s18, 1
      %p73 = por %p71, %p72
      %p74 = scmp.ne.s32.totalorder %s66, %s69
      %p75 = scmp.eq.s32.totalorder %s18, 0
      %p76 = por %p74, %p75
      %p77 = scmp.ne.s32.totalorder %s66, %s69
      %p78 = scmp.eq.s32.totalorder %s23, 1
      %p79 = por %p77, %p78
      %p80 = scmp.ne.s32.totalorder %s69, %s70
      %p81 = scmp.eq.s32.totalorder %s23, 0
      %p82 = por %p80, %p81
      %p83 = scmp.ne.s32.totalorder %s69, %s70
      %p84 = scmp.eq.s32.totalorder %s24, 1
      %p85 = por %p83, %p84
      %p87 = scmp.ne.s32.totalorder %s70, %s86
      %p88 = scmp.eq.s32.totalorder %s24, 0
      %p89 = por %p87, %p88
      %s91 = sadd.s32 %s90, 1
      %p94 = scmp.eq.s32.totalorder %s18, 1
      %p95 = scmp.ne.s32.totalorder %s90, %s92
      %p96 = scmp.eq.s32.totalorder %s18, 0
      %p97 = por %p95, %p96
      %p98 = scmp.ne.s32.totalorder %s90, %s92
      %p99 = scmp.eq.s32.totalorder %s23, 1
      %p100 = por %p98, %p99
      %p101 = scmp.ne.s32.totalorder %s92, %s93
      %p102 = scmp.eq.s32.totalorder %s23, 0
      %p103 = por %p101, %p102
      %p104 = scmp.ne.s32.totalorder %s92, %s93
      %p105 = scmp.eq.s32.totalorder %s24, 1
      %p106 = por %p104, %p105
      %p108 = scmp.ne.s32.totalorder %s93, %s107
      %p109 = scmp.eq.s32.totalorder %s24, 0
      %p110 = por %p108, %p109
      %s111 = ssub.s32 %s26, %s33
      %p112 = scmp.eq.s32.totalorder %s111, 0
      %s114 = sadd.s32 %s113, 1
      %s115 = scalar_select %p112, %s113, %s114
      %p118 = pneg %p112
      %p119 = scmp.eq.s32.totalorder %s18, 1
      %p120 = por %p118, %p119
      %p121 = scmp.ne.s32.totalorder %s113, %s116
      %p122 = scmp.eq.s32.totalorder %s18, 0
      %p123 = por %p121, %p122
      %p124 = scmp.ne.s32.totalorder %s113, %s116
      %p125 = scmp.eq.s32.totalorder %s23, 1
      %p126 = por %p124, %p125
      %p127 = scmp.ne.s32.totalorder %s116, %s117
      %p128 = scmp.eq.s32.totalorder %s23, 0
      %p129 = por %p127, %p128
      %p130 = scmp.ne.s32.totalorder %s116, %s117
      %p131 = scmp.eq.s32.totalorder %s24, 1
      %p132 = por %p130, %p131
      %p134 = scmp.ne.s32.totalorder %s117, %s133
      %p135 = scmp.eq.s32.totalorder %s24, 0
      %p136 = por %p134, %p135
      %s137 = ssub.s32 %s25, %s37
      %s138 = ssub.s32 %s26, %s33
      %s139 = sor.u32 %s137, %s138
      %p140 = scmp.eq.s32.totalorder %s139, 0
      %s142 = sadd.s32 %s141, 1
      %s143 = scalar_select %p140, %s141, %s142
      %p146 = pneg %p140
      %p147 = scmp.eq.s32.totalorder %s18, 1
      %p148 = por %p146, %p147
      %p149 = scmp.ne.s32.totalorder %s141, %s144
      %p150 = scmp.eq.s32.totalorder %s18, 0
      %p151 = por %p149, %p150
      %p152 = scmp.ne.s32.totalorder %s141, %s144
      %p153 = scmp.eq.s32.totalorder %s23, 1
      %p154 = por %p152, %p153
      %p155 = scmp.ne.s32.totalorder %s144, %s145
      %p156 = scmp.eq.s32.totalorder %s23, 0
      %p157 = por %p155, %p156
      %p158 = scmp.ne.s32.totalorder %s144, %s145
      %p159 = scmp.eq.s32.totalorder %s24, 1
      %p160 = por %p158, %p159
      %p162 = scmp.ne.s32.totalorder %s145, %s161
      %p163 = scmp.eq.s32.totalorder %s24, 0
      %p164 = por %p162, %p163
      %p165 = scmp.le.s32.totalorder 1, %s18
      %p166 = scmp.lt.s32.totalorder %s18, 3
      %p167 = pnand %p165, %p166
      %p168 = pneg %p167
      // Predicated region
      $region9: #{tpu_custom_call.1} parent=5 // pred_check
        _
      $region10: #{tpu_custom_call.1} parent=5 // pred_check_branch
        %170 = sbr.rel (%p167) target = $region12
      $region11: #{tpu_custom_call.1} parent=5 // pred_region
        %s171 = ssub.s32 %s18, 1
        // Predicated region
        $region13: #{tpu_custom_call.1} parent=11 // pred_check
          %p172 = pneg %p82
        $region14: #{tpu_custom_call.1} parent=11 // pred_check_branch
          %174 = sbr.rel (%p172) target = $region16
        $region15: #{tpu_custom_call.1} parent=11 // pred_region
          %s176 = ssub.s32 2048, 2048
          %177 = vsyncadd [#allocation6], %s176
          %s178 = smul.addr %s28, 128
          %s179 = scalar_lea.hbm %s1, %s178
          %s180 = sshll.u32 [#allocation5], 4
          %s181 = int_to_ptr.vmem [resolvable:$true] %s180
          %186 = dma.hbm_to_vmem [thread:$0]  %s179, 2048, %s181, [#allocation6], 128, 128, 8
        $region16: #{tpu_custom_call.1} parent=11 // pred_fallthru
          _
        // Predicated region
        $region17: #{tpu_custom_call.1} parent=11 // pred_check
          %p187 = pneg %p103
        $region18: #{tpu_custom_call.1} parent=11 // pred_check_branch
          %189 = sbr.rel (%p187) target = $region20
        $region19: #{tpu_custom_call.1} parent=11 // pred_region
          %s191 = ssub.s32 256, 256
          %192 = vsyncadd [#allocation6], %s191
          %s193 = sshll.u32 [#allocation7], 4
          %s194 = int_to_ptr.vmem [resolvable:$true] %s193
          %199 = dma.hbm_to_vmem [thread:$0]  %s2, 256, %s194, [#allocation6], 128, 128, 8
        $region20: #{tpu_custom_call.1} parent=11 // pred_fallthru
          _
        // Predicated region
        $region21: #{tpu_custom_call.1} parent=11 // pred_check
          %p200 = pneg %p129
        $region22: #{tpu_custom_call.1} parent=11 // pred_check_branch
          %202 = sbr.rel (%p200) target = $region24
        $region23: #{tpu_custom_call.1} parent=11 // pred_region
          %s204 = ssub.s32 256, 256
          %205 = vsyncadd [#allocation9], %s204
          %s206 = smul.addr %s28, 128
          %s207 = scalar_lea.hbm %s3, %s206
          %s208 = sshll.u32 [#allocation8], 4
          %s209 = int_to_ptr.vmem [resolvable:$true] %s208
          %214 = dma.hbm_to_vmem [thread:$0]  %s207, 256, %s209, [#allocation9], 128, 128, 8
        $region24: #{tpu_custom_call.1} parent=11 // pred_fallthru
          _
      $region12: #{tpu_custom_call.1} parent=5 // pred_fallthru
        _
      %p215 = scmp.lt.s32.totalorder %s18, 2
      // Predicated region
      $region25: #{tpu_custom_call.1} parent=5 // pred_check
        %p216 = pneg %p215
      $region26: #{tpu_custom_call.1} parent=5 // pred_check_branch
        %218 = sbr.rel (%p216) target = $region28
      $region27: #{tpu_custom_call.1} parent=5 // pred_region
        // Predicated region
        $region29: #{tpu_custom_call.1} parent=27 // pred_check
          %p219 = pneg %p50
        $region30: #{tpu_custom_call.1} parent=27 // pred_check_branch
          %221 = sbr.rel (%p219) target = $region32
        $region31: #{tpu_custom_call.1} parent=27 // pred_region
          %s222 = sand.u32 %s40, 1
          %s223 = scalar_lea.sflag [#allocation3], %s222
          %s224 = sand.u32 %s40, 1
          %s225 = smul.addr %s224, 128
          %s226 = scalar_lea.vmem [#allocation2], %s225
          %s227 = smul.u32 16, %s25
          %s229 = ssub.s32 2048, 2048
          %230 = vsyncadd %s223, %s229
          %s231 = smul.addr %s227, 128
          %s232 = scalar_lea.hbm %s0, %s231
          %s233 = sshll.u32 %s226, 4
          %s234 = int_to_ptr.vmem [resolvable:$true] %s233
          %239 = dma.hbm_to_vmem [thread:$0]  %s232, 2048, %s234, %s223, 128, 128, 8
        $region32: #{tpu_custom_call.1} parent=27 // pred_fallthru
          _
      $region28: #{tpu_custom_call.1} parent=5 // pred_fallthru
        _
      %p240 = scmp.le.s32.totalorder 1, %s18
      %p241 = scmp.lt.s32.totalorder %s18, 3
      %p242 = pnand %p240, %p241
      %p243 = pneg %p242
      // Predicated region
      $region33: #{tpu_custom_call.1} parent=5 // pred_check
        _
      $region34: #{tpu_custom_call.1} parent=5 // pred_check_branch
        %245 = sbr.rel (%p242) target = $region36
      $region35: #{tpu_custom_call.1} parent=5 // pred_region
        %s246 = ssub.s32 %s18, 1
        %s247 = sand.u32 %s43, 1
        %s248 = scalar_lea.sflag [#allocation3], %s247
        %s249 = sand.u32 %s43, 1
        %s250 = smul.addr %s249, 128
        %s251 = scalar_lea.vmem [#allocation2], %s250
        // Predicated region
        $region37: #{tpu_custom_call.1} parent=35 // pred_check
          %p252 = pneg %p56
        $region38: #{tpu_custom_call.1} parent=35 // pred_check_branch
          %254 = sbr.rel (%p252) target = $region40
        $region39: #{tpu_custom_call.1} parent=35 // pred_region
          %255 = dma.done %s248, 2048
        $region40: #{tpu_custom_call.1} parent=35 // pred_fallthru
          _
        // Predicated region
        $region41: #{tpu_custom_call.1} parent=35 // pred_check
          %p256 = pneg %p82
        $region42: #{tpu_custom_call.1} parent=35 // pred_check_branch
          %258 = sbr.rel (%p256) target = $region44
        $region43: #{tpu_custom_call.1} parent=35 // pred_region
          %259 = dma.done [#allocation6], 2048
        $region44: #{tpu_custom_call.1} parent=35 // pred_fallthru
          _
        // Predicated region
        $region45: #{tpu_custom_call.1} parent=35 // pred_check
          %p260 = pneg %p103
        $region46: #{tpu_custom_call.1} parent=35 // pred_check_branch
          %262 = sbr.rel (%p260) target = $region48
        $region47: #{tpu_custom_call.1} parent=35 // pred_region
          %263 = dma.done [#allocation6], 256
        $region48: #{tpu_custom_call.1} parent=35 // pred_fallthru
          _
        // Predicated region
        $region49: #{tpu_custom_call.1} parent=35 // pred_check
          %p264 = pneg %p129
        $region50: #{tpu_custom_call.1} parent=35 // pred_check_branch
          %266 = sbr.rel (%p264) target = $region52
        $region51: #{tpu_custom_call.1} parent=35 // pred_region
          %267 = dma.done [#allocation9], 256
        $region52: #{tpu_custom_call.1} parent=35 // pred_fallthru
          _
        %s268 = sand.u32 %s43, 1
        %s269 = scalar_lea.sflag [#allocation3], %s268
        %s270 = sand.u32 %s43, 1
        %s271 = smul.addr %s270, 128
        %s272 = scalar_lea.vmem [#allocation2], %s271
        %p273 = pneg %p56
        %p274 = pneg %p53
        %p275 = pneg %p82
        %p276 = pneg %p79
        %p277 = pneg %p103
        %p278 = pneg %p100
        %p279 = pneg %p129
        %p280 = pneg %p126
        %p281 = pneg %p157
        %p282 = pneg %p154
        %s283 = sand.u32 %s144, 1
        %s284 = scalar_lea.sflag [#allocation4], %s283
        %s285 = sand.u32 %s144, 1
        %s286 = smul.addr %s285, 64
        %s287 = scalar_lea.vmem [#allocation10], %s286
        %s288 = smul.u32 16, %s27
        %s289 = smul.u32 4, %s27
        %v290 = vld [vmem:[%s251] sm:$0xff]
        %v291 = vld [vmem:[%s251 + $0x8] sm:$0xff]
        %v292 = vld [vmem:[%s251 + $0x10] sm:$0xff]
        %v293 = vld [vmem:[%s251 + $0x18] sm:$0xff]
        %v294 = vld [vmem:[%s251 + $0x20] sm:$0xff]
        %v295 = vld [vmem:[%s251 + $0x28] sm:$0xff]
        %v296 = vld [vmem:[%s251 + $0x30] sm:$0xff]
        %v297 = vld [vmem:[%s251 + $0x38] sm:$0xff]
        %v298 = vld [vmem:[%s251 + $0x40] sm:$0xff]
        %v299 = vld [vmem:[%s251 + $0x48] sm:$0xff]
        %v300 = vld [vmem:[%s251 + $0x50] sm:$0xff]
        %v301 = vld [vmem:[%s251 + $0x58] sm:$0xff]
        %v302 = vld [vmem:[%s251 + $0x60] sm:$0xff]
        %v303 = vld [vmem:[%s251 + $0x68] sm:$0xff]
        %v304 = vld [vmem:[%s251 + $0x70] sm:$0xff]
        %v305 = vld [vmem:[%s251 + $0x78] sm:$0xff]
        %v306 = vld [vmem:[#allocation5] sm:$0xff]
        %v307 = vld [vmem:[#allocation5 + $0x8] sm:$0xff]
        %v308 = vld [vmem:[#allocation5 + $0x10] sm:$0xff]
        %v309 = vld [vmem:[#allocation5 + $0x18] sm:$0xff]
        %v310 = vld [vmem:[#allocation5 + $0x20] sm:$0xff]
        %v311 = vld [vmem:[#allocation5 + $0x28] sm:$0xff]
        %v312 = vld [vmem:[#allocation5 + $0x30] sm:$0xff]
        %v313 = vld [vmem:[#allocation5 + $0x38] sm:$0xff]
        %v314 = vld [vmem:[#allocation5 + $0x40] sm:$0xff]
        %v315 = vld [vmem:[#allocation5 + $0x48] sm:$0xff]
        %v316 = vld [vmem:[#allocation5 + $0x50] sm:$0xff]
        %v317 = vld [vmem:[#allocation5 + $0x58] sm:$0xff]
        %v318 = vld [vmem:[#allocation5 + $0x60] sm:$0xff]
        %v319 = vld [vmem:[#allocation5 + $0x68] sm:$0xff]
        %v320 = vld [vmem:[#allocation5 + $0x70] sm:$0xff]
        %v321 = vld [vmem:[#allocation5 + $0x78] sm:$0xff]
        %322 = vmatprep.subr.mxu0 0.0
        %323 = vmatpush1.msra.mxu0 %v306
        %324 = vmatprep.subr.mxu0 0.0
        %325 = vmatpush1.msra.mxu0 %v307
        %326 = vmatprep.subr.mxu0 0.0
        %327 = vmatpush1.msra.mxu0 %v308
        %328 = vmatprep.subr.mxu0 0.0
        %329 = vmatpush1.msra.mxu0 %v309
        %330 = vmatprep.subr.mxu0 0.0
        %331 = vmatpush1.msra.mxu0 %v310
        %332 = vmatprep.subr.mxu0 0.0
        %333 = vmatpush1.msra.mxu0 %v311
        %334 = vmatprep.subr.mxu0 0.0
        %335 = vmatpush1.msra.mxu0 %v312
        %336 = vmatprep.subr.mxu0 0.0
        %337 = vmatpush1.msra.mxu0 %v313
        %338 = vmatprep.subr.mxu0 0.0
        %339 = vmatpush1.msra.mxu0 %v314
        %340 = vmatprep.subr.mxu0 0.0
        %341 = vmatpush1.msra.mxu0 %v315
        %342 = vmatprep.subr.mxu0 0.0
        %343 = vmatpush1.msra.mxu0 %v316
        %344 = vmatprep.subr.mxu0 0.0
        %345 = vmatpush1.msra.mxu0 %v317
        %346 = vmatprep.subr.mxu0 0.0
        %347 = vmatpush1.msra.mxu0 %v318
        %348 = vmatprep.subr.mxu0 0.0
        %349 = vmatpush1.msra.mxu0 %v319
        %350 = vmatprep.subr.mxu0 0.0
        %351 = vmatpush1.msra.mxu0 %v320
        %352 = vmatprep.subr.mxu0 0.0
        %353 = vmatpush1.msra.mxu0 %v321
        %354 = vmatprep.subr.mxu0 0.0
        %355 = vmatpush1.msra.mxu0 0.0
        %356 = vmatprep.subr.mxu0 0.0
        %357 = vmatpush1.msra.mxu0 0.0
        %358 = vmatprep.subr.mxu0 0.0
        %359 = vmatpush1.msra.mxu0 0.0
        %360 = vmatprep.subr.mxu0 0.0
        %361 = vmatpush1.msra.mxu0 0.0
        %362 = vmatprep.subr.mxu0 0.0
        %363 = vmatpush1.msra.mxu0 0.0
        %364 = vmatprep.subr.mxu0 0.0
        %365 = vmatpush1.msra.mxu0 0.0
        %366 = vmatprep.subr.mxu0 0.0
        %367 = vmatpush1.msra.mxu0 0.0
        %368 = vmatprep.subr.mxu0 0.0
        %369 = vmatpush1.msra.mxu0 0.0
        %370 = vmatprep.subr.mxu0 0.0
        %371 = vmatpush1.msra.mxu0 0.0
        %372 = vmatprep.subr.mxu0 0.0
        %373 = vmatpush1.msra.mxu0 0.0
        %374 = vmatprep.subr.mxu0 0.0
        %375 = vmatpush1.msra.mxu0 0.0
        %376 = vmatprep.subr.mxu0 0.0
        %377 = vmatpush1.msra.mxu0 0.0
        %378 = vmatprep.subr.mxu0 0.0
        %379 = vmatpush1.msra.mxu0 0.0
        %380 = vmatprep.subr.mxu0 0.0
        %381 = vmatpush1.msra.mxu0 0.0
        %382 = vmatprep.subr.mxu0 0.0
        %383 = vmatpush1.msra.mxu0 0.0
        %384 = vmatprep.subr.mxu0 0.0
        %385 = vmatpush1.msra.mxu0 0.0
        %386 = vmatprep.mubr.f32.mxu0 0.0
        %387 = vmatmul.mubr.f32.gmra.mrb[0].mxu0 %v290
        %v388 = vpop.f32.mrb[0].mxu0
        %v389 = vadd.f32 0.0, %v388
        %v390 = vpop.f32.mrb[0].mxu0
        %391 = vmatprep.mubr.f32.mxu0 0.0
        %392 = vmatmul.mubr.f32.gmra.mrb[0].mxu0 %v291
        %v393 = vpop.f32.mrb[0].mxu0
        %v394 = vadd.f32 0.0, %v393
        %v395 = vpop.f32.mrb[0].mxu0
        %396 = vmatprep.mubr.f32.mxu0 0.0
        %397 = vmatmul.mubr.f32.gmra.mrb[0].mxu0 %v292
        %v398 = vpop.f32.mrb[0].mxu0
        %v399 = vadd.f32 0.0, %v398
        %v400 = vpop.f32.mrb[0].mxu0
        %401 = vmatprep.mubr.f32.mxu0 0.0
        %402 = vmatmul.mubr.f32.gmra.mrb[0].mxu0 %v293
        %v403 = vpop.f32.mrb[0].mxu0
        %v404 = vadd.f32 0.0, %v403
        %v405 = vpop.f32.mrb[0].mxu0
        %406 = vmatprep.mubr.f32.mxu0 0.0
        %407 = vmatmul.mubr.f32.gmra.mrb[0].mxu0 %v294
        %v408 = vpop.f32.mrb[0].mxu0
        %v409 = vadd.f32 0.0, %v408
        %v410 = vpop.f32.mrb[0].mxu0
        %411 = vmatprep.mubr.f32.mxu0 0.0
        %412 = vmatmul.mubr.f32.gmra.mrb[0].mxu0 %v295
        %v413 = vpop.f32.mrb[0].mxu0
        %v414 = vadd.f32 0.0, %v413
        %v415 = vpop.f32.mrb[0].mxu0
        %416 = vmatprep.mubr.f32.mxu0 0.0
        %417 = vmatmul.mubr.f32.gmra.mrb[0].mxu0 %v296
        %v418 = vpop.f32.mrb[0].mxu0
        %v419 = vadd.f32 0.0, %v418
        %v420 = vpop.f32.mrb[0].mxu0
        %421 = vmatprep.mubr.f32.mxu0 0.0
        %422 = vmatmul.mubr.f32.gmra.mrb[0].mxu0 %v297
        %v423 = vpop.f32.mrb[0].mxu0
        %v424 = vadd.f32 0.0, %v423
        %v425 = vpop.f32.mrb[0].mxu0
        %426 = vmatprep.mubr.f32.mxu0 0.0
        %427 = vmatmul.mubr.f32.gmra.mrb[0].mxu0 %v298
        %v428 = vpop.f32.mrb[0].mxu0
        %v429 = vadd.f32 0.0, %v428
        %v430 = vpop.f32.mrb[0].mxu0
        %431 = vmatprep.mubr.f32.mxu0 0.0
        %432 = vmatmul.mubr.f32.gmra.mrb[0].mxu0 %v299
        %v433 = vpop.f32.mrb[0].mxu0
        %v434 = vadd.f32 0.0, %v433
        %v435 = vpop.f32.mrb[0].mxu0
        %436 = vmatprep.mubr.f32.mxu0 0.0
        %437 = vmatmul.mubr.f32.gmra.mrb[0].mxu0 %v300
        %v438 = vpop.f32.mrb[0].mxu0
        %v439 = vadd.f32 0.0, %v438
        %v440 = vpop.f32.mrb[0].mxu0
        %441 = vmatprep.mubr.f32.mxu0 0.0
        %442 = vmatmul.mubr.f32.gmra.mrb[0].mxu0 %v301
        %v443 = vpop.f32.mrb[0].mxu0
        %v444 = vadd.f32 0.0, %v443
        %v445 = vpop.f32.mrb[0].mxu0
        %446 = vmatprep.mubr.f32.mxu0 0.0
        %447 = vmatmul.mubr.f32.gmra.mrb[0].mxu0 %v302
        %v448 = vpop.f32.mrb[0].mxu0
        %v449 = vadd.f32 0.0, %v448
        %v450 = vpop.f32.mrb[0].mxu0
        %451 = vmatprep.mubr.f32.mxu0 0.0
        %452 = vmatmul.mubr.f32.gmra.mrb[0].mxu0 %v303
        %v453 = vpop.f32.mrb[0].mxu0
        %v454 = vadd.f32 0.0, %v453
        %v455 = vpop.f32.mrb[0].mxu0
        %456 = vmatprep.mubr.f32.mxu0 0.0
        %457 = vmatmul.mubr.f32.gmra.mrb[0].mxu0 %v304
        %v458 = vpop.f32.mrb[0].mxu0
        %v459 = vadd.f32 0.0, %v458
        %v460 = vpop.f32.mrb[0].mxu0
        %461 = vmatprep.mubr.f32.mxu0 0.0
        %462 = vmatmul.mubr.f32.gmra.mrb[0].mxu0 %v305
        %v463 = vpop.f32.mrb[0].mxu0
        %v464 = vadd.f32 0.0, %v463
        %v465 = vpop.f32.mrb[0].mxu0
        %466 = vdwg.mxu0
        %v467 = vld [vmem:[#allocation7] sm:$0xff]
        %v468 = vld [vmem:[#allocation7 + $0x8] sm:$0xff]
        %vm469 = vcmask 261120
        %v471 = vsel %vm469, %v467, 0
        %v474 = vsel %vm469, %v468, 0
        %476 = vmatprep.subr.mxu0 0.0
        %477 = vmatpush1.msra.mxu0 %v389
        %478 = vmatprep.subr.mxu0 0.0
        %479 = vmatpush1.msra.mxu0 %v394
        %480 = vmatprep.subr.mxu0 0.0
        %481 = vmatpush1.msra.mxu0 %v399
        %482 = vmatprep.subr.mxu0 0.0
        %483 = vmatpush1.msra.mxu0 %v404
        %484 = vmatprep.subr.mxu0 0.0
        %485 = vmatpush1.msra.mxu0 0.0
        %486 = vmatprep.subr.mxu0 0.0
        %487 = vmatpush1.msra.mxu0 0.0
        %488 = vmatprep.subr.mxu0 0.0
        %489 = vmatpush1.msra.mxu0 0.0
        %490 = vmatprep.subr.mxu0 0.0
        %491 = vmatpush1.msra.mxu0 0.0
        %492 = vmatprep.subr.mxu0 0.0
        %493 = vmatpush1.msra.mxu0 0.0
        %494 = vmatprep.subr.mxu0 0.0
        %495 = vmatpush1.msra.mxu0 0.0
        %496 = vmatprep.subr.mxu0 0.0
        %497 = vmatpush1.msra.mxu0 0.0
        %498 = vmatprep.subr.mxu0 0.0
        %499 = vmatpush1.msra.mxu0 0.0
        %500 = vmatprep.subr.mxu0 0.0
        %501 = vmatpush1.msra.mxu0 0.0
        %502 = vmatprep.subr.mxu0 0.0
        %503 = vmatpush1.msra.mxu0 0.0
        %504 = vmatprep.subr.mxu0 0.0
        %505 = vmatpush1.msra.mxu0 0.0
        %506 = vmatprep.subr.mxu0 0.0
        %507 = vmatpush1.msra.mxu0 0.0
        %508 = vmatprep.subr.mxu0 0.0
        %509 = vmatpush1.msra.mxu0 0.0
        %510 = vmatprep.subr.mxu0 0.0
        %511 = vmatpush1.msra.mxu0 0.0
        %512 = vmatprep.subr.mxu0 0.0
        %513 = vmatpush1.msra.mxu0 0.0
        %514 = vmatprep.subr.mxu0 0.0
        %515 = vmatpush1.msra.mxu0 0.0
        %516 = vmatprep.subr.mxu0 0.0
        %517 = vmatpush1.msra.mxu0 0.0
        %518 = vmatprep.subr.mxu0 0.0
        %519 = vmatpush1.msra.mxu0 0.0
        %520 = vmatprep.subr.mxu0 0.0
        %521 = vmatpush1.msra.mxu0 0.0
        %522 = vmatprep.subr.mxu0 0.0
        %523 = vmatpush1.msra.mxu0 0.0
        %524 = vmatprep.subr.mxu0 0.0
        %525 = vmatpush1.msra.mxu0 0.0
        %526 = vmatprep.subr.mxu0 0.0
        %527 = vmatpush1.msra.mxu0 0.0
        %528 = vmatprep.subr.mxu0 0.0
        %529 = vmatpush1.msra.mxu0 0.0
        %530 = vmatprep.subr.mxu0 0.0
        %531 = vmatpush1.msra.mxu0 0.0
        %532 = vmatprep.subr.mxu0 0.0
        %533 = vmatpush1.msra.mxu0 0.0
        %534 = vmatprep.subr.mxu0 0.0
        %535 = vmatpush1.msra.mxu0 0.0
        %536 = vmatprep.subr.mxu0 0.0
        %537 = vmatpush1.msra.mxu0 0.0
        %538 = vmatprep.subr.mxu0 0.0
        %539 = vmatpush1.msra.mxu0 0.0
        %540 = vmatprep.mubr.f32.mxu0 0.0
        %541 = vmatmul.mubr.f32.gmra.mrb[0].mxu0 %v471
        %v542 = vpop.f32.mrb[0].mxu0
        %v543 = vadd.f32 0.0, %v542
        %v544 = vpop.f32.mrb[0].mxu0
        %545 = vmatprep.mubr.f32.mxu0 0.0
        %546 = vmatmul.mubr.f32.gmra.mrb[0].mxu0 %v474
        %v547 = vpop.f32.mrb[0].mxu0
        %v548 = vadd.f32 0.0, %v547
        %v549 = vpop.f32.mrb[0].mxu0
        %550 = vdwg.mxu0
        %551 = vmatprep.subr.mxu0 0.0
        %552 = vmatpush1.msra.mxu0 %v409
        %553 = vmatprep.subr.mxu0 0.0
        %554 = vmatpush1.msra.mxu0 %v414
        %555 = vmatprep.subr.mxu0 0.0
        %556 = vmatpush1.msra.mxu0 %v419
        %557 = vmatprep.subr.mxu0 0.0
        %558 = vmatpush1.msra.mxu0 %v424
        %559 = vmatprep.subr.mxu0 0.0
        %560 = vmatpush1.msra.mxu0 0.0
        %561 = vmatprep.subr.mxu0 0.0
        %562 = vmatpush1.msra.mxu0 0.0
        %563 = vmatprep.subr.mxu0 0.0
        %564 = vmatpush1.msra.mxu0 0.0
        %565 = vmatprep.subr.mxu0 0.0
        %566 = vmatpush1.msra.mxu0 0.0
        %567 = vmatprep.subr.mxu0 0.0
        %568 = vmatpush1.msra.mxu0 0.0
        %569 = vmatprep.subr.mxu0 0.0
        %570 = vmatpush1.msra.mxu0 0.0
        %571 = vmatprep.subr.mxu0 0.0
        %572 = vmatpush1.msra.mxu0 0.0
        %573 = vmatprep.subr.mxu0 0.0
        %574 = vmatpush1.msra.mxu0 0.0
        %575 = vmatprep.subr.mxu0 0.0
        %576 = vmatpush1.msra.mxu0 0.0
        %577 = vmatprep.subr.mxu0 0.0
        %578 = vmatpush1.msra.mxu0 0.0
        %579 = vmatprep.subr.mxu0 0.0
        %580 = vmatpush1.msra.mxu0 0.0
        %581 = vmatprep.subr.mxu0 0.0
        %582 = vmatpush1.msra.mxu0 0.0
        %583 = vmatprep.subr.mxu0 0.0
        %584 = vmatpush1.msra.mxu0 0.0
        %585 = vmatprep.subr.mxu0 0.0
        %586 = vmatpush1.msra.mxu0 0.0
        %587 = vmatprep.subr.mxu0 0.0
        %588 = vmatpush1.msra.mxu0 0.0
        %589 = vmatprep.subr.mxu0 0.0
        %590 = vmatpush1.msra.mxu0 0.0
        %591 = vmatprep.subr.mxu0 0.0
        %592 = vmatpush1.msra.mxu0 0.0
        %593 = vmatprep.subr.mxu0 0.0
        %594 = vmatpush1.msra.mxu0 0.0
        %595 = vmatprep.subr.mxu0 0.0
        %596 = vmatpush1.msra.mxu0 0.0
        %597 = vmatprep.subr.mxu0 0.0
        %598 = vmatpush1.msra.mxu0 0.0
        %599 = vmatprep.subr.mxu0 0.0
        %600 = vmatpush1.msra.mxu0 0.0
        %601 = vmatprep.subr.mxu0 0.0
        %602 = vmatpush1.msra.mxu0 0.0
        %603 = vmatprep.subr.mxu0 0.0
        %604 = vmatpush1.msra.mxu0 0.0
        %605 = vmatprep.subr.mxu0 0.0
        %606 = vmatpush1.msra.mxu0 0.0
        %607 = vmatprep.subr.mxu0 0.0
        %608 = vmatpush1.msra.mxu0 0.0
        %609 = vmatprep.subr.mxu0 0.0
        %610 = vmatpush1.msra.mxu0 0.0
        %611 = vmatprep.subr.mxu0 0.0
        %612 = vmatpush1.msra.mxu0 0.0
        %613 = vmatprep.subr.mxu0 0.0
        %614 = vmatpush1.msra.mxu0 0.0
        %615 = vmatprep.mubr.f32.mxu0 0.0
        %616 = vmatmul.mubr.f32.gmra.mrb[0].mxu0 %v471
        %v617 = vpop.f32.mrb[0].mxu0
        %v618 = vadd.f32 0.0, %v617
        %v619 = vpop.f32.mrb[0].mxu0
        %620 = vmatprep.mubr.f32.mxu0 0.0
        %621 = vmatmul.mubr.f32.gmra.mrb[0].mxu0 %v474
        %v622 = vpop.f32.mrb[0].mxu0
        %v623 = vadd.f32 0.0, %v622
        %v624 = vpop.f32.mrb[0].mxu0
        %625 = vdwg.mxu0
        %626 = vmatprep.subr.mxu0 0.0
        %627 = vmatpush1.msra.mxu0 %v429
        %628 = vmatprep.subr.mxu0 0.0
        %629 = vmatpush1.msra.mxu0 %v434
        %630 = vmatprep.subr.mxu0 0.0
        %631 = vmatpush1.msra.mxu0 %v439
        %632 = vmatprep.subr.mxu0 0.0
        %633 = vmatpush1.msra.mxu0 %v444
        %634 = vmatprep.subr.mxu0 0.0
        %635 = vmatpush1.msra.mxu0 0.0
        %636 = vmatprep.subr.mxu0 0.0
        %637 = vmatpush1.msra.mxu0 0.0
        %638 = vmatprep.subr.mxu0 0.0
        %639 = vmatpush1.msra.mxu0 0.0
        %640 = vmatprep.subr.mxu0 0.0
        %641 = vmatpush1.msra.mxu0 0.0
        %642 = vmatprep.subr.mxu0 0.0
        %643 = vmatpush1.msra.mxu0 0.0
        %644 = vmatprep.subr.mxu0 0.0
        %645 = vmatpush1.msra.mxu0 0.0
        %646 = vmatprep.subr.mxu0 0.0
        %647 = vmatpush1.msra.mxu0 0.0
        %648 = vmatprep.subr.mxu0 0.0
        %649 = vmatpush1.msra.mxu0 0.0
        %650 = vmatprep.subr.mxu0 0.0
        %651 = vmatpush1.msra.mxu0 0.0
        %652 = vmatprep.subr.mxu0 0.0
        %653 = vmatpush1.msra.mxu0 0.0
        %654 = vmatprep.subr.mxu0 0.0
        %655 = vmatpush1.msra.mxu0 0.0
        %656 = vmatprep.subr.mxu0 0.0
        %657 = vmatpush1.msra.mxu0 0.0
        %658 = vmatprep.subr.mxu0 0.0
        %659 = vmatpush1.msra.mxu0 0.0
        %660 = vmatprep.subr.mxu0 0.0
        %661 = vmatpush1.msra.mxu0 0.0
        %662 = vmatprep.subr.mxu0 0.0
        %663 = vmatpush1.msra.mxu0 0.0
        %664 = vmatprep.subr.mxu0 0.0
        %665 = vmatpush1.msra.mxu0 0.0
        %666 = vmatprep.subr.mxu0 0.0
        %667 = vmatpush1.msra.mxu0 0.0
        %668 = vmatprep.subr.mxu0 0.0
        %669 = vmatpush1.msra.mxu0 0.0
        %670 = vmatprep.subr.mxu0 0.0
        %671 = vmatpush1.msra.mxu0 0.0
        %672 = vmatprep.subr.mxu0 0.0
        %673 = vmatpush1.msra.mxu0 0.0
        %674 = vmatprep.subr.mxu0 0.0
        %675 = vmatpush1.msra.mxu0 0.0
        %676 = vmatprep.subr.mxu0 0.0
        %677 = vmatpush1.msra.mxu0 0.0
        %678 = vmatprep.subr.mxu0 0.0
        %679 = vmatpush1.msra.mxu0 0.0
        %680 = vmatprep.subr.mxu0 0.0
        %681 = vmatpush1.msra.mxu0 0.0
        %682 = vmatprep.subr.mxu0 0.0
        %683 = vmatpush1.msra.mxu0 0.0
        %684 = vmatprep.subr.mxu0 0.0
        %685 = vmatpush1.msra.mxu0 0.0
        %686 = vmatprep.subr.mxu0 0.0
        %687 = vmatpush1.msra.mxu0 0.0
        %688 = vmatprep.subr.mxu0 0.0
        %689 = vmatpush1.msra.mxu0 0.0
        %690 = vmatprep.mubr.f32.mxu0 0.0
        %691 = vmatmul.mubr.f32.gmra.mrb[0].mxu0 %v471
        %v692 = vpop.f32.mrb[0].mxu0
        %v693 = vadd.f32 0.0, %v692
        %v694 = vpop.f32.mrb[0].mxu0
        %695 = vmatprep.mubr.f32.mxu0 0.0
        %696 = vmatmul.mubr.f32.gmra.mrb[0].mxu0 %v474
        %v697 = vpop.f32.mrb[0].mxu0
        %v698 = vadd.f32 0.0, %v697
        %v699 = vpop.f32.mrb[0].mxu0
        %700 = vdwg.mxu0
        %701 = vmatprep.subr.mxu0 0.0
        %702 = vmatpush1.msra.mxu0 %v449
        %703 = vmatprep.subr.mxu0 0.0
        %704 = vmatpush1.msra.mxu0 %v454
        %705 = vmatprep.subr.mxu0 0.0
        %706 = vmatpush1.msra.mxu0 %v459
        %707 = vmatprep.subr.mxu0 0.0
        %708 = vmatpush1.msra.mxu0 %v464
        %709 = vmatprep.subr.mxu0 0.0
        %710 = vmatpush1.msra.mxu0 0.0
        %711 = vmatprep.subr.mxu0 0.0
        %712 = vmatpush1.msra.mxu0 0.0
        %713 = vmatprep.subr.mxu0 0.0
        %714 = vmatpush1.msra.mxu0 0.0
        %715 = vmatprep.subr.mxu0 0.0
        %716 = vmatpush1.msra.mxu0 0.0
        %717 = vmatprep.subr.mxu0 0.0
        %718 = vmatpush1.msra.mxu0 0.0
        %719 = vmatprep.subr.mxu0 0.0
        %720 = vmatpush1.msra.mxu0 0.0
        %721 = vmatprep.subr.mxu0 0.0
        %722 = vmatpush1.msra.mxu0 0.0
        %723 = vmatprep.subr.mxu0 0.0
        %724 = vmatpush1.msra.mxu0 0.0
        %725 = vmatprep.subr.mxu0 0.0
        %726 = vmatpush1.msra.mxu0 0.0
        %727 = vmatprep.subr.mxu0 0.0
        %728 = vmatpush1.msra.mxu0 0.0
        %729 = vmatprep.subr.mxu0 0.0
        %730 = vmatpush1.msra.mxu0 0.0
        %731 = vmatprep.subr.mxu0 0.0
        %732 = vmatpush1.msra.mxu0 0.0
        %733 = vmatprep.subr.mxu0 0.0
        %734 = vmatpush1.msra.mxu0 0.0
        %735 = vmatprep.subr.mxu0 0.0
        %736 = vmatpush1.msra.mxu0 0.0
        %737 = vmatprep.subr.mxu0 0.0
        %738 = vmatpush1.msra.mxu0 0.0
        %739 = vmatprep.subr.mxu0 0.0
        %740 = vmatpush1.msra.mxu0 0.0
        %741 = vmatprep.subr.mxu0 0.0
        %742 = vmatpush1.msra.mxu0 0.0
        %743 = vmatprep.subr.mxu0 0.0
        %744 = vmatpush1.msra.mxu0 0.0
        %745 = vmatprep.subr.mxu0 0.0
        %746 = vmatpush1.msra.mxu0 0.0
        %747 = vmatprep.subr.mxu0 0.0
        %748 = vmatpush1.msra.mxu0 0.0
        %749 = vmatprep.subr.mxu0 0.0
        %750 = vmatpush1.msra.mxu0 0.0
        %751 = vmatprep.subr.mxu0 0.0
        %752 = vmatpush1.msra.mxu0 0.0
        %753 = vmatprep.subr.mxu0 0.0
        %754 = vmatpush1.msra.mxu0 0.0
        %755 = vmatprep.subr.mxu0 0.0
        %756 = vmatpush1.msra.mxu0 0.0
        %757 = vmatprep.subr.mxu0 0.0
        %758 = vmatpush1.msra.mxu0 0.0
        %759 = vmatprep.subr.mxu0 0.0
        %760 = vmatpush1.msra.mxu0 0.0
        %761 = vmatprep.subr.mxu0 0.0
        %762 = vmatpush1.msra.mxu0 0.0
        %763 = vmatprep.subr.mxu0 0.0
        %764 = vmatpush1.msra.mxu0 0.0
        %765 = vmatprep.mubr.f32.mxu0 0.0
        %766 = vmatmul.mubr.f32.gmra.mrb[0].mxu0 %v471
        %v767 = vpop.f32.mrb[0].mxu0
        %v768 = vadd.f32 0.0, %v767
        %v769 = vpop.f32.mrb[0].mxu0
        %770 = vmatprep.mubr.f32.mxu0 0.0
        %771 = vmatmul.mubr.f32.gmra.mrb[0].mxu0 %v474
        %v772 = vpop.f32.mrb[0].mxu0
        %v773 = vadd.f32 0.0, %v772
        %v774 = vpop.f32.mrb[0].mxu0
        %775 = vdwg.mxu0
        %v776 = vld [vmem:[#allocation8] sm:$0xff]
        %v777 = vld [vmem:[#allocation8 + $0x8] sm:$0xff]
        %v778 = vmul.f32 %v543, %v776
        %v779 = vmul.f32 %v548, %v777
        %v780 = vmul.f32 %v618, %v776
        %v781 = vmul.f32 %v623, %v777
        %v782 = vmul.f32 %v693, %v776
        %v783 = vmul.f32 %v698, %v777
        %v784 = vmul.f32 %v768, %v776
        %v785 = vmul.f32 %v773, %v777
        %786 = vst [vmem:[%s287] sm:$0xff] %v778
        %787 = vst [vmem:[%s287 + $0x8] sm:$0xff] %v779
        %788 = vst [vmem:[%s287 + $0x10] sm:$0xff] %v780
        %789 = vst [vmem:[%s287 + $0x18] sm:$0xff] %v781
        %790 = vst [vmem:[%s287 + $0x20] sm:$0xff] %v782
        %791 = vst [vmem:[%s287 + $0x28] sm:$0xff] %v783
        %792 = vst [vmem:[%s287 + $0x30] sm:$0xff] %v784
        %793 = vst [vmem:[%s287 + $0x38] sm:$0xff] %v785
        %s794 = sand.u32 %s144, 1
        %s795 = scalar_lea.sflag [#allocation4], %s794
        %s796 = sand.u32 %s144, 1
        %s797 = smul.addr %s796, 64
        %s798 = scalar_lea.vmem [#allocation10], %s797
        // Predicated region
        $region53: #{tpu_custom_call.1} parent=35 // pred_check
          %p799 = pneg %p154
        $region54: #{tpu_custom_call.1} parent=35 // pred_check_branch
          %801 = sbr.rel (%p799) target = $region56
        $region55: #{tpu_custom_call.1} parent=35 // pred_region
          %s802 = smul.u32 4, %s27
          %s804 = ssub.s32 1024, 1024
          %805 = vsyncadd %s795, %s804
          %s806 = smul.addr %s802, 2
          %s807 = sadd.s32 %s28, %s806
          %s808 = smul.addr %s807, 128
          %s809 = scalar_lea.hbm %s4, %s808
          %s810 = sshll.u32 %s798, 4
          %s811 = int_to_ptr.vmem [resolvable:$true] %s810
          %816 = dma.vmem_to_hbm [thread:$0]  %s811, 1024, %s809, %s795, 128, 128, 8
        $region56: #{tpu_custom_call.1} parent=35 // pred_fallthru
          _
      $region36: #{tpu_custom_call.1} parent=5 // pred_fallthru
        _
      %p817 = scmp.le.s32.totalorder 2, %s18
      // Predicated region
      $region57: #{tpu_custom_call.1} parent=5 // pred_check
        %p818 = pneg %p817
      $region58: #{tpu_custom_call.1} parent=5 // pred_check_branch
        %820 = sbr.rel (%p818) target = $region60
      $region59: #{tpu_custom_call.1} parent=5 // pred_region
        %s821 = ssub.s32 %s18, 2
        // Predicated region
        $region61: #{tpu_custom_call.1} parent=59 // pred_check
          %p822 = pneg %p160
        $region62: #{tpu_custom_call.1} parent=59 // pred_check_branch
          %824 = sbr.rel (%p822) target = $region64
        $region63: #{tpu_custom_call.1} parent=59 // pred_region
          %s825 = sand.u32 %s145, 1
          %s826 = scalar_lea.sflag [#allocation4], %s825
          %s827 = sand.u32 %s145, 1
          %s828 = smul.addr %s827, 64
          %s829 = scalar_lea.vmem [#allocation10], %s828
          %830 = dma.done %s826, 1024
        $region64: #{tpu_custom_call.1} parent=59 // pred_fallthru
          _
      $region60: #{tpu_custom_call.1} parent=5 // pred_fallthru
        _
    $region6: #{tpu_custom_call.1} parent=1 // loop_footer
      %s22 = sadd.s32 1, %s18
    $region7: #{tpu_custom_call.1} parent=1 // loop_footer_branch
      %17 = sbr.rel target = $region3
    $region8: #{tpu_custom_call.1} parent=1 // loop_exit
      _
    %831 = vsyncpa [#allocation3], 1
    %s832 = scalar_lea.sflag [#allocation3], 1
    %833 = vsyncpa %s832, 1
    %834 = vsyncpa [#allocation6], 1
    %835 = vsyncpa [#allocation9], 1
    %836 = vsyncpa [#allocation4], 1
    %s837 = scalar_lea.sflag [#allocation4], 1
    %838 = vsyncpa %s837, 1

</llo_original>
